<compile_context>
chip_gen: v7x
topology: tpu7x:2x2x1
jax: 0.10.0
libtpu: 0.0.40
codegen_flags: <defaults>
</compile_context>

<pallas_src>
import math
import numpy as np
import jax
import jax.numpy as jnp
from jax.experimental import pallas as pl
from jax.experimental.pallas import tpu as pltpu


def _elu(x):
    # ELU, alpha = 1.0 (PyTorch default).  exp overflow lanes are discarded by
    # the where-select, never multiplied, so this is numerically safe.
    return jnp.where(x > 0, x, jnp.exp(x) - 1.0)


def _sigmoid(x):
    # exact reciprocal (approx=False default) so the 1e-5 correctness check
    # against the pure-JAX reference holds.
    return pl.reciprocal(1.0 + jnp.exp(-x))


def network_kernel(obs_ref, goal_ref,
                   w0_ref,       # (obs_size, H)   common_layer Linear 0
                   w1_ref,       # (H, H)          common_layer Linear 1
                   w1h_ref,      # (H, H)          fc1 weight rows for h
                   wh_ref,       # (H, 3)          fused [fc2 | fc3 | fc4]
                   slab_ref,     # (8, H)  rows: b0,b1,bf1,g0,g1,g2,bh_pad,0
                   out_ref):     # (TB, 3)    [sigmoid(fc2)|tanh(fc3)|elu(fc4)]
    # Sublane-row reads of the packed small-parameter slab (aligned, cheap).
    b0  = slab_ref[0:1, :]
    b1  = slab_ref[1:2, :]
    bf1 = slab_ref[2:3, :]
    g0  = slab_ref[3:4, :]        # W_fc1 row H   (goal feature 0)
    g1  = slab_ref[4:5, :]        # W_fc1 row H+1 (goal feature 1)
    g2  = slab_ref[5:6, :]        # W_fc1 row H+2 (goal feature 2)
    bh  = slab_ref[6:7, 0:3]      # fused head bias

    obs = obs_ref[...]
    goal = goal_ref[...]

    # common_layer: Linear -> ELU -> Linear -> ELU
    h = _elu(jnp.dot(obs, w0_ref[...], preferred_element_type=jnp.float32) + b0)
    h = _elu(jnp.dot(h, w1_ref[...], preferred_element_type=jnp.float32) + b1)

    # fc1 on cat([h, goal], -1):
    #   MXU handles the H-wide contraction; the 3 goal features are added as
    #   rank-1 VPU updates (no degenerate K=3 MXU matmul).
    z1 = jnp.dot(h, w1h_ref[...], preferred_element_type=jnp.float32) + bf1
    z1 = z1 + goal[:, 0:1] * g0 + goal[:, 1:2] * g1 + goal[:, 2:3] * g2
    h = _elu(z1)

    # fused heads: columns = [fc2, fc3, fc4]
    z = jnp.dot(h, wh_ref[...], preferred_element_type=jnp.float32) + bh  # (TB, 3)
    col = jax.lax.broadcasted_iota(jnp.int32, z.shape, 1)
    out_ref[...] = jnp.where(col == 0, _sigmoid(z),
                             jnp.where(col == 1, jnp.tanh(z), _elu(z)))


def _pick_batch_tile(B):
    if B <= 512:
        return B
    for tb in (512, 256, 128, 64, 32, 16, 8):
        if B % tb == 0:
            return tb
    return B


def network_forward(obs, goal, kparams, *, batch_tile=None):
    B, obs_size = obs.shape
    tb = batch_tile if batch_tile is not None else _pick_batch_tile(B)
    assert B % tb == 0, f"batch {B} not divisible by batch tile {tb}"
    grid = (B // tb,)

    def resident(shape):
        # Weights / packed params stay resident in VMEM across the batch grid.
        return pl.BlockSpec(shape, lambda i: (0,) * len(shape))

    out = pl.pallas_call(
        network_kernel,
        out_shape=jax.ShapeDtypeStruct((B, 3), jnp.float32),
        grid=grid,
        in_specs=[
            pl.BlockSpec((tb, obs_size), lambda i: (i, 0)),   # obs
            pl.BlockSpec((tb, 3), lambda i: (i, 0)),          # goal
            resident(kparams["w0"].shape),
            resident(kparams["w1"].shape),
            resident(kparams["w1h"].shape),
            resident(kparams["w_heads"].shape),
            resident(kparams["slab"].shape),
        ],
        out_specs=pl.BlockSpec((tb, 3), lambda i: (i, 0)),
        compiler_params=pltpu.CompilerParams(
            dimension_semantics=("parallel",)),
    )(obs, goal, kparams["w0"], kparams["w1"], kparams["w1h"],
      kparams["w_heads"], kparams["slab"])

    mean = out[:, 0:2]
    value = out[:, 2:3]
    # State-independent diagonal variance is batch independent: compute in XLA.
    var = jnp.broadcast_to(jax.nn.sigmoid(kparams["var_param"]), (B, 2))
    return mean, var, value


def init_params(key, obs_size, hidden_size):
    """Deterministic PyTorch-style Linear init: U(-1/sqrt(fan_in), 1/sqrt(fan_in))."""
    def linear(key, fan_in, fan_out):
        kw, kb = jax.random.split(key)
        bound = 1.0 / math.sqrt(fan_in)
        w = jax.random.uniform(kw, (fan_in, fan_out), jnp.float32, -bound, bound)
        b = jax.random.uniform(kb, (1, fan_out), jnp.float32, -bound, bound)
        return w, b

    keys = jax.random.split(key, 6)
    w0, b0 = linear(keys[0], obs_size, hidden_size)
    w1, b1 = linear(keys[1], hidden_size, hidden_size)
    wf1, bf1 = linear(keys[2], hidden_size + 3, hidden_size)
    w2, b2 = linear(keys[3], hidden_size, 1)
    w3, b3 = linear(keys[4], hidden_size, 1)
    w4, b4 = linear(keys[5], hidden_size, 1)
    return {
        "w0": w0, "b0": b0, "w1": w1, "b1": b1,
        "wf1": wf1, "bf1": bf1,
        "w2": w2, "b2": b2, "w3": w3, "b3": b3, "w4": w4, "b4": b4,
        "var_param": jnp.zeros((1, 2), jnp.float32),   # var_param_init = 0
    }


def pack_params(p, hidden_size):
    """Pack logical params into the kernel layout (fused heads + (8, H) slab)."""
    H = hidden_size
    assert H >= 3, "hidden_size must be >= 3 to hold the fused head bias row"
    w1h = p["wf1"][:H]                                                # (H, H)
    w_heads = jnp.concatenate([p["w2"], p["w3"], p["w4"]], axis=1)    # (H, 3)
    b_heads = jnp.concatenate([p["b2"], p["b3"], p["b4"]], axis=1)    # (1, 3)
    bh_row = jnp.zeros((1, H), jnp.float32).at[:, 0:3].set(b_heads)   # (1, H)
    slab = jnp.concatenate(
        [p["b0"], p["b1"], p["bf1"],
         p["wf1"][H:H + 1], p["wf1"][H + 1:H + 2], p["wf1"][H + 2:H + 3],
         bh_row, jnp.zeros((1, H), jnp.float32)], axis=0)             # (8, H)
    return {
        "w0": p["w0"], "w1": p["w1"], "w1h": w1h,
        "w_heads": w_heads, "slab": slab,
        "var_param": p["var_param"],
    }


def reference_forward(obs, goal, p):
    """Pure-JAX reference matching the PyTorch module."""
    h = jax.nn.elu(obs @ p["w0"] + p["b0"])
    h = jax.nn.elu(h @ p["w1"] + p["b1"])
    h = jnp.concatenate([h, goal], axis=-1)
    h = jax.nn.elu(h @ p["wf1"] + p["bf1"])
    value = jax.nn.elu(h @ p["w4"] + p["b4"])
    hv = jax.nn.sigmoid(h @ p["w2"] + p["b2"])
    hw = jnp.tanh(h @ p["w3"] + p["b3"])
    mean = jnp.concatenate([hv, hw], axis=-1)
    var = jnp.broadcast_to(jax.nn.sigmoid(p["var_param"]), mean.shape)
    return mean, var, value


if __name__ == "__main__":
    B, OBS, HIDDEN = 16, 32, 32
    key = jax.random.PRNGKey(0)
    k_obs, k_goal, k_par = jax.random.split(key, 3)

    obs = jax.random.normal(k_obs, (B, OBS), jnp.float32)
    goal = jax.random.normal(k_goal, (B, 3), jnp.float32)
    params = init_params(k_par, OBS, HIDDEN)
    kparams = pack_params(params, HIDDEN)

    # batch_tile=8 exercises a 2-step batch grid with resident weights.
    mean, var, value = network_forward(obs, goal, kparams, batch_tile=8)
    jax.block_until_ready((mean, var, value))

    ref_mean, ref_var, ref_value = reference_forward(obs, goal, params)
    np.testing.assert_allclose(np.asarray(mean), np.asarray(ref_mean),
                               rtol=1e-5, atol=1e-5)
    np.testing.assert_allclose(np.asarray(var), np.asarray(ref_var),
                               rtol=1e-5, atol=1e-5)
    np.testing.assert_allclose(np.asarray(value), np.asarray(ref_value),
                               rtol=1e-5, atol=1e-5)

    print("KERNEL_OK")
</pallas_src>

<mosaic_0001>
module attributes {stable_mosaic.version = 11 : i64} {
  func.func @network_kernel(%arg0: i32, %arg1: memref<8x32xf32, #tpu.memory_space<vmem>>, %arg2: memref<8x3xf32, #tpu.memory_space<vmem>>, %arg3: memref<32x32xf32, #tpu.memory_space<vmem>>, %arg4: memref<32x32xf32, #tpu.memory_space<vmem>>, %arg5: memref<32x32xf32, #tpu.memory_space<vmem>>, %arg6: memref<32x3xf32, #tpu.memory_space<vmem>>, %arg7: memref<8x32xf32, #tpu.memory_space<vmem>>, %arg8: memref<8x3xf32, #tpu.memory_space<vmem>>) attributes {dimension_semantics = [#tpu.dimension_semantics<parallel>], iteration_bounds = array<i64: 2>, scalar_prefetch = 0 : i64, scratch_operands = 0 : i64, tpu.core_type = #tpu.core_type<tc>, window_params = [{transform_indices = @transform_0, window_bounds = array<i64: 8, 32>}, {transform_indices = @transform_1, window_bounds = array<i64: 8, 3>}, {pipeline_mode = #tpu.pipeline_mode<synchronous>, transform_indices = @transform_2, window_bounds = array<i64: 32, 32>}, {pipeline_mode = #tpu.pipeline_mode<synchronous>, transform_indices = @transform_3, window_bounds = array<i64: 32, 32>}, {pipeline_mode = #tpu.pipeline_mode<synchronous>, transform_indices = @transform_4, window_bounds = array<i64: 32, 32>}, {pipeline_mode = #tpu.pipeline_mode<synchronous>, transform_indices = @transform_5, window_bounds = array<i64: 32, 3>}, {pipeline_mode = #tpu.pipeline_mode<synchronous>, transform_indices = @transform_6, window_bounds = array<i64: 8, 32>}, {transform_indices = @transform_7, window_bounds = array<i64: 8, 3>}]} {
    %c0 = arith.constant 0 : index
    %c0_0 = arith.constant 0 : index
    %0 = vector.load %arg7[%c0, %c0_0] : memref<8x32xf32, #tpu.memory_space<vmem>>, vector<1x32xf32>
    %c1 = arith.constant 1 : index
    %c0_1 = arith.constant 0 : index
    %1 = vector.load %arg7[%c1, %c0_1] : memref<8x32xf32, #tpu.memory_space<vmem>>, vector<1x32xf32>
    %c2 = arith.constant 2 : index
    %c0_2 = arith.constant 0 : index
    %2 = vector.load %arg7[%c2, %c0_2] : memref<8x32xf32, #tpu.memory_space<vmem>>, vector<1x32xf32>
    %c3 = arith.constant 3 : index
    %c0_3 = arith.constant 0 : index
    %3 = vector.load %arg7[%c3, %c0_3] : memref<8x32xf32, #tpu.memory_space<vmem>>, vector<1x32xf32>
    %c4 = arith.constant 4 : index
    %c0_4 = arith.constant 0 : index
    %4 = vector.load %arg7[%c4, %c0_4] : memref<8x32xf32, #tpu.memory_space<vmem>>, vector<1x32xf32>
    %c5 = arith.constant 5 : index
    %c0_5 = arith.constant 0 : index
    %5 = vector.load %arg7[%c5, %c0_5] : memref<8x32xf32, #tpu.memory_space<vmem>>, vector<1x32xf32>
    %c6 = arith.constant 6 : index
    %c0_6 = arith.constant 0 : index
    %6 = vector.load %arg7[%c6, %c0_6] : memref<8x32xf32, #tpu.memory_space<vmem>>, vector<1x3xf32>
    %c0_7 = arith.constant 0 : index
    %c0_8 = arith.constant 0 : index
    %7 = vector.load %arg1[%c0_7, %c0_8] : memref<8x32xf32, #tpu.memory_space<vmem>>, vector<8x32xf32>
    %c0_9 = arith.constant 0 : index
    %c0_10 = arith.constant 0 : index
    %8 = vector.load %arg2[%c0_9, %c0_10] : memref<8x3xf32, #tpu.memory_space<vmem>>, vector<8x3xf32>
    %c0_11 = arith.constant 0 : index
    %c0_12 = arith.constant 0 : index
    %9 = vector.load %arg3[%c0_11, %c0_12] : memref<32x32xf32, #tpu.memory_space<vmem>>, vector<32x32xf32>
    %cst = arith.constant dense<0.000000e+00> : vector<8x32xf32>
    %10 = tpu.matmul %7, %9, %cst {dimension_numbers = #tpu.dot_dimension_numbers<[1], [0], [0], [1], [0, 0, 1, 1], [], []>} : vector<8x32xf32>, vector<32x32xf32>, vector<8x32xf32> -> vector<8x32xf32>
    %11 = vector.broadcast %0 : vector<1x32xf32> to vector<8x32xf32>
    %12 = arith.addf %10, %11 : vector<8x32xf32>
    %cst_13 = arith.constant 0.000000e+00 : f32
    %13 = vector.broadcast %cst_13 : f32 to vector<8x32xf32>
    %14 = arith.cmpf ogt, %12, %13 : vector<8x32xf32>
    %15 = math.exp %12 : vector<8x32xf32>
    %cst_14 = arith.constant 1.000000e+00 : f32
    %16 = vector.broadcast %cst_14 : f32 to vector<8x32xf32>
    %17 = arith.subf %15, %16 : vector<8x32xf32>
    %18 = arith.select %14, %12, %17 : vector<8x32xi1>, vector<8x32xf32>
    %c0_15 = arith.constant 0 : index
    %c0_16 = arith.constant 0 : index
    %19 = vector.load %arg4[%c0_15, %c0_16] : memref<32x32xf32, #tpu.memory_space<vmem>>, vector<32x32xf32>
    %cst_17 = arith.constant dense<0.000000e+00> : vector<8x32xf32>
    %20 = tpu.matmul %18, %19, %cst_17 {dimension_numbers = #tpu.dot_dimension_numbers<[1], [0], [0], [1], [0, 0, 1, 1], [], []>} : vector<8x32xf32>, vector<32x32xf32>, vector<8x32xf32> -> vector<8x32xf32>
    %21 = vector.broadcast %1 : vector<1x32xf32> to vector<8x32xf32>
    %22 = arith.addf %20, %21 : vector<8x32xf32>
    %cst_18 = arith.constant 0.000000e+00 : f32
    %23 = vector.broadcast %cst_18 : f32 to vector<8x32xf32>
    %24 = arith.cmpf ogt, %22, %23 : vector<8x32xf32>
    %25 = math.exp %22 : vector<8x32xf32>
    %cst_19 = arith.constant 1.000000e+00 : f32
    %26 = vector.broadcast %cst_19 : f32 to vector<8x32xf32>
    %27 = arith.subf %25, %26 : vector<8x32xf32>
    %28 = arith.select %24, %22, %27 : vector<8x32xi1>, vector<8x32xf32>
    %c0_20 = arith.constant 0 : index
    %c0_21 = arith.constant 0 : index
    %29 = vector.load %arg5[%c0_20, %c0_21] : memref<32x32xf32, #tpu.memory_space<vmem>>, vector<32x32xf32>
    %cst_22 = arith.constant dense<0.000000e+00> : vector<8x32xf32>
    %30 = tpu.matmul %28, %29, %cst_22 {dimension_numbers = #tpu.dot_dimension_numbers<[1], [0], [0], [1], [0, 0, 1, 1], [], []>} : vector<8x32xf32>, vector<32x32xf32>, vector<8x32xf32> -> vector<8x32xf32>
    %31 = vector.broadcast %2 : vector<1x32xf32> to vector<8x32xf32>
    %32 = arith.addf %30, %31 : vector<8x32xf32>
    %33 = vector.extract_strided_slice %8 {offsets = [0, 0], sizes = [8, 1], strides = [1, 1]} : vector<8x3xf32> to vector<8x1xf32>
    %34 = vector.broadcast %33 : vector<8x1xf32> to vector<8x32xf32>
    %35 = vector.broadcast %3 : vector<1x32xf32> to vector<8x32xf32>
    %36 = arith.mulf %34, %35 : vector<8x32xf32>
    %37 = arith.addf %32, %36 : vector<8x32xf32>
    %38 = vector.extract_strided_slice %8 {offsets = [0, 1], sizes = [8, 1], strides = [1, 1]} : vector<8x3xf32> to vector<8x1xf32>
    %39 = vector.broadcast %38 : vector<8x1xf32> to vector<8x32xf32>
    %40 = vector.broadcast %4 : vector<1x32xf32> to vector<8x32xf32>
    %41 = arith.mulf %39, %40 : vector<8x32xf32>
    %42 = arith.addf %37, %41 : vector<8x32xf32>
    %43 = vector.extract_strided_slice %8 {offsets = [0, 2], sizes = [8, 1], strides = [1, 1]} : vector<8x3xf32> to vector<8x1xf32>
    %44 = vector.broadcast %43 : vector<8x1xf32> to vector<8x32xf32>
    %45 = vector.broadcast %5 : vector<1x32xf32> to vector<8x32xf32>
    %46 = arith.mulf %44, %45 : vector<8x32xf32>
    %47 = arith.addf %42, %46 : vector<8x32xf32>
    %cst_23 = arith.constant 0.000000e+00 : f32
    %48 = vector.broadcast %cst_23 : f32 to vector<8x32xf32>
    %49 = arith.cmpf ogt, %47, %48 : vector<8x32xf32>
    %50 = math.exp %47 : vector<8x32xf32>
    %cst_24 = arith.constant 1.000000e+00 : f32
    %51 = vector.broadcast %cst_24 : f32 to vector<8x32xf32>
    %52 = arith.subf %50, %51 : vector<8x32xf32>
    %53 = arith.select %49, %47, %52 : vector<8x32xi1>, vector<8x32xf32>
    %c0_25 = arith.constant 0 : index
    %c0_26 = arith.constant 0 : index
    %54 = vector.load %arg6[%c0_25, %c0_26] : memref<32x3xf32, #tpu.memory_space<vmem>>, vector<32x3xf32>
    %cst_27 = arith.constant dense<0.000000e+00> : vector<8x3xf32>
    %55 = tpu.matmul %53, %54, %cst_27 {dimension_numbers = #tpu.dot_dimension_numbers<[1], [0], [0], [1], [0, 0, 1, 1], [], []>} : vector<8x32xf32>, vector<32x3xf32>, vector<8x3xf32> -> vector<8x3xf32>
    %56 = vector.broadcast %6 : vector<1x3xf32> to vector<8x3xf32>
    %57 = arith.addf %55, %56 : vector<8x3xf32>
    %58 = tpu.iota {dimensions = array<i32: 1>} : vector<8x3xi32>
    %c0_i32 = arith.constant 0 : i32
    %59 = vector.broadcast %c0_i32 : i32 to vector<8x3xi32>
    %60 = arith.cmpi eq, %58, %59 : vector<8x3xi32>
    %cst_28 = arith.constant 0.000000e+00 : f32
    %61 = vector.broadcast %cst_28 : f32 to vector<8x3xf32>
    %62 = arith.subf %61, %57 : vector<8x3xf32>
    %63 = math.exp %62 : vector<8x3xf32>
    %cst_29 = arith.constant 1.000000e+00 : f32
    %64 = vector.broadcast %cst_29 : f32 to vector<8x3xf32>
    %65 = arith.addf %64, %63 : vector<8x3xf32>
    %66 = tpu.reciprocal %65 : vector<8x3xf32> -> vector<8x3xf32>
    %c1_i32 = arith.constant 1 : i32
    %67 = vector.broadcast %c1_i32 : i32 to vector<8x3xi32>
    %68 = arith.cmpi eq, %58, %67 : vector<8x3xi32>
    %69 = math.tanh %57 : vector<8x3xf32>
    %cst_30 = arith.constant 0.000000e+00 : f32
    %70 = vector.broadcast %cst_30 : f32 to vector<8x3xf32>
    %71 = arith.cmpf ogt, %57, %70 : vector<8x3xf32>
    %72 = math.exp %57 : vector<8x3xf32>
    %cst_31 = arith.constant 1.000000e+00 : f32
    %73 = vector.broadcast %cst_31 : f32 to vector<8x3xf32>
    %74 = arith.subf %72, %73 : vector<8x3xf32>
    %75 = arith.select %71, %57, %74 : vector<8x3xi1>, vector<8x3xf32>
    %76 = arith.select %68, %69, %75 : vector<8x3xi1>, vector<8x3xf32>
    %77 = arith.select %60, %66, %76 : vector<8x3xi1>, vector<8x3xf32>
    %c0_32 = arith.constant 0 : index
    %c0_33 = arith.constant 0 : index
    %78 = vector.load %arg8[%c0_32, %c0_33] : memref<8x3xf32, #tpu.memory_space<vmem>>, vector<8x3xf32>
    tpu.vector_store %arg8[%c0_32, %c0_33], %77 {strides = array<i32>} : memref<8x3xf32, #tpu.memory_space<vmem>>, vector<8x3xf32>,
    return
  }
  func.func @transform_0(%arg0: i32) -> (i32, i32) {
    %c0_i32 = arith.constant 0 : i32
    %c0_i32_0 = arith.constant 0 : i32
    return %arg0, %c0_i32 : i32, i32
  }
  func.func @transform_1(%arg0: i32) -> (i32, i32) {
    %c0_i32 = arith.constant 0 : i32
    %c0_i32_0 = arith.constant 0 : i32
    return %arg0, %c0_i32 : i32, i32
  }
  func.func @transform_2(%arg0: i32) -> (i32, i32) {
    %c0_i32 = arith.constant 0 : i32
    %c0_i32_0 = arith.constant 0 : i32
    %c0_i32_1 = arith.constant 0 : i32
    return %c0_i32, %c0_i32_0 : i32, i32
  }
  func.func @transform_3(%arg0: i32) -> (i32, i32) {
    %c0_i32 = arith.constant 0 : i32
    %c0_i32_0 = arith.constant 0 : i32
    %c0_i32_1 = arith.constant 0 : i32
    return %c0_i32, %c0_i32_0 : i32, i32
  }
  func.func @transform_4(%arg0: i32) -> (i32, i32) {
    %c0_i32 = arith.constant 0 : i32
    %c0_i32_0 = arith.constant 0 : i32
    %c0_i32_1 = arith.constant 0 : i32
    return %c0_i32, %c0_i32_0 : i32, i32
  }
  func.func @transform_5(%arg0: i32) -> (i32, i32) {
    %c0_i32 = arith.constant 0 : i32
    %c0_i32_0 = arith.constant 0 : i32
    %c0_i32_1 = arith.constant 0 : i32
    return %c0_i32, %c0_i32_0 : i32, i32
  }
  func.func @transform_6(%arg0: i32) -> (i32, i32) {
    %c0_i32 = arith.constant 0 : i32
    %c0_i32_0 = arith.constant 0 : i32
    %c0_i32_1 = arith.constant 0 : i32
    return %c0_i32, %c0_i32_0 : i32, i32
  }
  func.func @transform_7(%arg0: i32) -> (i32, i32) {
    %c0_i32 = arith.constant 0 : i32
    %c0_i32_0 = arith.constant 0 : i32
    return %arg0, %c0_i32 : i32, i32
  }
}

</mosaic_0001>

<llo_original>
// kernel: tpu_custom_call.1
$region0: #{tpu_custom_call.1}
  #allocation0 [shape = 'u32[]', space=smem, size = 0x4, offset = 0x4, fixed_abs, tag = 'smem constant byte address 0x4 - core index']
  #allocation1 [shape = 'u32[144,128]{1,0:T(1,128)}', space=vmem, size = 0x12000, scoped, tag = 'internal scratch']
  %s0 = inlined_call_operand.hbm [shape: f32[16,32], index: 0, kind: input, shape index: {}]
  %s1 = inlined_call_operand.vmem [shape: f32[16,3], index: 1, kind: input, shape index: {}]
  %s2 = inlined_call_operand.vmem [shape: f32[32,32], index: 2, kind: input, shape index: {}]
  %s3 = inlined_call_operand.vmem [shape: f32[32,32], index: 3, kind: input, shape index: {}]
  %s4 = inlined_call_operand.hbm [shape: f32[32,32], index: 4, kind: input, shape index: {}]
  %s5 = inlined_call_operand.vmem [shape: f32[32,3], index: 5, kind: input, shape index: {}]
  %s6 = inlined_call_operand.vmem [shape: f32[8,32], index: 6, kind: input, shape index: {}]
  %s7 = inlined_call_operand.vmem [shape: f32[16,3], index: 7, kind: output, shape index: {}]
  %s8 = sld [smem:[#allocation0]]
  $region69: #{tpu_custom_call.1} parent=0
    _
  %s10 = ssub.s32 1, %s8
  %s11 = scalar_select 0, %s10, %s8
  $region1: #{tpu_custom_call.1} parent=0
    #allocation2 [shape = 'u8[8192]{0}', space=vmem, size = 0x2000, scoped, tag = 'input window, operand 0']
    #allocation3 [shape = 's32[2]{0}', space=sflag, size = 0x8, scoped, tag = 'scoped memory for tpu_custom_call.1']
    #allocation4 [shape = 'u8[16384]{0}', space=vmem, size = 0x4000, scoped, tag = 'input window, operand 4, single buffered']
    #allocation5 [shape = 's32[1]{0}', space=sflag, size = 0x4, scoped, tag = 'scoped memory for tpu_custom_call.1']
    %12 = vsyncpa [#allocation3], 0
    %s13 = scalar_lea.sflag [#allocation3], 1
    %14 = vsyncpa %s13, 0
    %15 = vsyncpa [#allocation5], 0
    loop: start=0, step=1, limit=4
    $region2: #{tpu_custom_call.1} parent=1 // loop_pre_header
      _
    $region3: #{tpu_custom_call.1} parent=1 // loop_header
      %s17 = sphi 0, %s21
      %p18 = scmp.ge.s32.totalorder %s17, 4
      %s27 = sphi 0, %s29
      %s30 = sphi 0, %s27
      %s31 = sphi 0, %s30
      %s47 = sphi 0, %s31
      %s53 = sphi 0, %s55
      %s56 = sphi 0, %s53
      %s57 = sphi 0, %s56
      %s73 = sphi 0, %s57
      %s77 = sphi 0, %s77
      %s79 = sphi 0, %s77
      %s80 = sphi 0, %s79
      %s94 = sphi 0, %s80
      %s98 = sphi 0, %s98
      %s100 = sphi 0, %s98
      %s101 = sphi 0, %s100
      %s115 = sphi 0, %s101
      %s119 = sphi 0, %s119
      %s121 = sphi 0, %s119
      %s122 = sphi 0, %s121
      %s136 = sphi 0, %s122
      %s140 = sphi 0, %s140
      %s142 = sphi 0, %s140
      %s143 = sphi 0, %s142
      %s157 = sphi 0, %s143
      %s161 = sphi 0, %s161
      %s163 = sphi 0, %s161
      %s164 = sphi 0, %s163
      %s178 = sphi 0, %s164
      %s184 = sphi 0, %s186
      %s187 = sphi 0, %s184
      %s188 = sphi 0, %s187
      %s204 = sphi 0, %s188
    $region4: #{tpu_custom_call.1} parent=1 // loop_header_branch
      %20 = sbr.rel (%p18) target = $region8
    $region5: #{tpu_custom_call.1} parent=1 // loop_body
      %s22 = ssub.s32 %s17, 1
      %s23 = ssub.s32 %s17, 2
      %s24 = sadd.s32 %s17, 1
      %s25 = ssub.s32 %s17, %s24
      %p26 = scmp.eq.s32.totalorder %s25, 0
      %s28 = sadd.s32 %s27, 1
      %s29 = scalar_select %p26, %s27, %s28
      %p32 = pneg %p26
      %p33 = scmp.eq.s32.totalorder %s17, 1
      %p34 = por %p32, %p33
      %p35 = scmp.ne.s32.totalorder %s27, %s30
      %p36 = scmp.eq.s32.totalorder %s17, 0
      %p37 = por %p35, %p36
      %p38 = scmp.ne.s32.totalorder %s27, %s30
      %p39 = scmp.eq.s32.totalorder %s22, 1
      %p40 = por %p38, %p39
      %p41 = scmp.ne.s32.totalorder %s30, %s31
      %p42 = scmp.eq.s32.totalorder %s22, 0
      %p43 = por %p41, %p42
      %p44 = scmp.ne.s32.totalorder %s30, %s31
      %p45 = scmp.eq.s32.totalorder %s23, 1
      %p46 = por %p44, %p45
      %p48 = scmp.ne.s32.totalorder %s31, %s47
      %p49 = scmp.eq.s32.totalorder %s23, 0
      %p50 = por %p48, %p49
      %s51 = ssub.s32 %s17, %s24
      %p52 = scmp.eq.s32.totalorder %s51, 0
      %s54 = sadd.s32 %s53, 1
      %s55 = scalar_select %p52, %s53, %s54
      %p58 = pneg %p52
      %p59 = scmp.eq.s32.totalorder %s17, 1
      %p60 = por %p58, %p59
      %p61 = scmp.ne.s32.totalorder %s53, %s56
      %p62 = scmp.eq.s32.totalorder %s17, 0
      %p63 = por %p61, %p62
      %p64 = scmp.ne.s32.totalorder %s53, %s56
      %p65 = scmp.eq.s32.totalorder %s22, 1
      %p66 = por %p64, %p65
      %p67 = scmp.ne.s32.totalorder %s56, %s57
      %p68 = scmp.eq.s32.totalorder %s22, 0
      %p69 = por %p67, %p68
      %p70 = scmp.ne.s32.totalorder %s56, %s57
      %p71 = scmp.eq.s32.totalorder %s23, 1
      %p72 = por %p70, %p71
      %p74 = scmp.ne.s32.totalorder %s57, %s73
      %p75 = scmp.eq.s32.totalorder %s23, 0
      %p76 = por %p74, %p75
      %s78 = sadd.s32 %s77, 1
      %p81 = scmp.eq.s32.totalorder %s17, 1
      %p82 = scmp.ne.s32.totalorder %s77, %s79
      %p83 = scmp.eq.s32.totalorder %s17, 0
      %p84 = por %p82, %p83
      %p85 = scmp.ne.s32.totalorder %s77, %s79
      %p86 = scmp.eq.s32.totalorder %s22, 1
      %p87 = por %p85, %p86
      %p88 = scmp.ne.s32.totalorder %s79, %s80
      %p89 = scmp.eq.s32.totalorder %s22, 0
      %p90 = por %p88, %p89
      %p91 = scmp.ne.s32.totalorder %s79, %s80
      %p92 = scmp.eq.s32.totalorder %s23, 1
      %p93 = por %p91, %p92
      %p95 = scmp.ne.s32.totalorder %s80, %s94
      %p96 = scmp.eq.s32.totalorder %s23, 0
      %p97 = por %p95, %p96
      %s99 = sadd.s32 %s98, 1
      %p102 = scmp.eq.s32.totalorder %s17, 1
      %p103 = scmp.ne.s32.totalorder %s98, %s100
      %p104 = scmp.eq.s32.totalorder %s17, 0
      %p105 = por %p103, %p104
      %p106 = scmp.ne.s32.totalorder %s98, %s100
      %p107 = scmp.eq.s32.totalorder %s22, 1
      %p108 = por %p106, %p107
      %p109 = scmp.ne.s32.totalorder %s100, %s101
      %p110 = scmp.eq.s32.totalorder %s22, 0
      %p111 = por %p109, %p110
      %p112 = scmp.ne.s32.totalorder %s100, %s101
      %p113 = scmp.eq.s32.totalorder %s23, 1
      %p114 = por %p112, %p113
      %p116 = scmp.ne.s32.totalorder %s101, %s115
      %p117 = scmp.eq.s32.totalorder %s23, 0
      %p118 = por %p116, %p117
      %s120 = sadd.s32 %s119, 1
      %p123 = scmp.eq.s32.totalorder %s17, 1
      %p124 = scmp.ne.s32.totalorder %s119, %s121
      %p125 = scmp.eq.s32.totalorder %s17, 0
      %p126 = por %p124, %p125
      %p127 = scmp.ne.s32.totalorder %s119, %s121
      %p128 = scmp.eq.s32.totalorder %s22, 1
      %p129 = por %p127, %p128
      %p130 = scmp.ne.s32.totalorder %s121, %s122
      %p131 = scmp.eq.s32.totalorder %s22, 0
      %p132 = por %p130, %p131
      %p133 = scmp.ne.s32.totalorder %s121, %s122
      %p134 = scmp.eq.s32.totalorder %s23, 1
      %p135 = por %p133, %p134
      %p137 = scmp.ne.s32.totalorder %s122, %s136
      %p138 = scmp.eq.s32.totalorder %s23, 0
      %p139 = por %p137, %p138
      %s141 = sadd.s32 %s140, 1
      %p144 = scmp.eq.s32.totalorder %s17, 1
      %p145 = scmp.ne.s32.totalorder %s140, %s142
      %p146 = scmp.eq.s32.totalorder %s17, 0
      %p147 = por %p145, %p146
      %p148 = scmp.ne.s32.totalorder %s140, %s142
      %p149 = scmp.eq.s32.totalorder %s22, 1
      %p150 = por %p148, %p149
      %p151 = scmp.ne.s32.totalorder %s142, %s143
      %p152 = scmp.eq.s32.totalorder %s22, 0
      %p153 = por %p151, %p152
      %p154 = scmp.ne.s32.totalorder %s142, %s143
      %p155 = scmp.eq.s32.totalorder %s23, 1
      %p156 = por %p154, %p155
      %p158 = scmp.ne.s32.totalorder %s143, %s157
      %p159 = scmp.eq.s32.totalorder %s23, 0
      %p160 = por %p158, %p159
      %s162 = sadd.s32 %s161, 1
      %p165 = scmp.eq.s32.totalorder %s17, 1
      %p166 = scmp.ne.s32.totalorder %s161, %s163
      %p167 = scmp.eq.s32.totalorder %s17, 0
      %p168 = por %p166, %p167
      %p169 = scmp.ne.s32.totalorder %s161, %s163
      %p170 = scmp.eq.s32.totalorder %s22, 1
      %p171 = por %p169, %p170
      %p172 = scmp.ne.s32.totalorder %s163, %s164
      %p173 = scmp.eq.s32.totalorder %s22, 0
      %p174 = por %p172, %p173
      %p175 = scmp.ne.s32.totalorder %s163, %s164
      %p176 = scmp.eq.s32.totalorder %s23, 1
      %p177 = por %p175, %p176
      %p179 = scmp.ne.s32.totalorder %s164, %s178
      %p180 = scmp.eq.s32.totalorder %s23, 0
      %p181 = por %p179, %p180
      %s182 = ssub.s32 %s17, %s24
      %p183 = scmp.eq.s32.totalorder %s182, 0
      %s185 = sadd.s32 %s184, 1
      %s186 = scalar_select %p183, %s184, %s185
      %p189 = pneg %p183
      %p190 = scmp.eq.s32.totalorder %s17, 1
      %p191 = por %p189, %p190
      %p192 = scmp.ne.s32.totalorder %s184, %s187
      %p193 = scmp.eq.s32.totalorder %s17, 0
      %p194 = por %p192, %p193
      %p195 = scmp.ne.s32.totalorder %s184, %s187
      %p196 = scmp.eq.s32.totalorder %s22, 1
      %p197 = por %p195, %p196
      %p198 = scmp.ne.s32.totalorder %s187, %s188
      %p199 = scmp.eq.s32.totalorder %s22, 0
      %p200 = por %p198, %p199
      %p201 = scmp.ne.s32.totalorder %s187, %s188
      %p202 = scmp.eq.s32.totalorder %s23, 1
      %p203 = por %p201, %p202
      %p205 = scmp.ne.s32.totalorder %s188, %s204
      %p206 = scmp.eq.s32.totalorder %s23, 0
      %p207 = por %p205, %p206
      %p208 = scmp.le.s32.totalorder 1, %s17
      %p209 = scmp.lt.s32.totalorder %s17, 3
      %p210 = pnand %p208, %p209
      %p211 = pneg %p210
      // Predicated region
      $region9: #{tpu_custom_call.1} parent=5 // pred_check
        _
      $region10: #{tpu_custom_call.1} parent=5 // pred_check_branch
        %213 = sbr.rel (%p210) target = $region12
      $region11: #{tpu_custom_call.1} parent=5 // pred_region
        %s214 = ssub.s32 %s17, 1
        // Predicated region
        $region13: #{tpu_custom_call.1} parent=11 // pred_check
          %p215 = pneg %p90
        $region14: #{tpu_custom_call.1} parent=11 // pred_check_branch
          %217 = sbr.rel (%p215) target = $region16
        $region15: #{tpu_custom_call.1} parent=11 // pred_region
          _
        $region16: #{tpu_custom_call.1} parent=11 // pred_fallthru
          _
        // Predicated region
        $region17: #{tpu_custom_call.1} parent=11 // pred_check
          %p218 = pneg %p111
        $region18: #{tpu_custom_call.1} parent=11 // pred_check_branch
          %220 = sbr.rel (%p218) target = $region20
        $region19: #{tpu_custom_call.1} parent=11 // pred_region
          _
        $region20: #{tpu_custom_call.1} parent=11 // pred_fallthru
          _
        // Predicated region
        $region21: #{tpu_custom_call.1} parent=11 // pred_check
          %p221 = pneg %p132
        $region22: #{tpu_custom_call.1} parent=11 // pred_check_branch
          %223 = sbr.rel (%p221) target = $region24
        $region23: #{tpu_custom_call.1} parent=11 // pred_region
          %s225 = ssub.s32 512, 512
          %226 = vsyncadd [#allocation5], %s225
          %s227 = sshll.u32 [#allocation4], 4
          %s228 = int_to_ptr.vmem [resolvable:$true] %s227
          %233 = dma.hbm_to_vmem [thread:$0]  %s4, 512, %s228, [#allocation5], 128, 128, 8
        $region24: #{tpu_custom_call.1} parent=11 // pred_fallthru
          _
        // Predicated region
        $region25: #{tpu_custom_call.1} parent=11 // pred_check
          %p234 = pneg %p153
        $region26: #{tpu_custom_call.1} parent=11 // pred_check_branch
          %236 = sbr.rel (%p234) target = $region28
        $region27: #{tpu_custom_call.1} parent=11 // pred_region
          _
        $region28: #{tpu_custom_call.1} parent=11 // pred_fallthru
          _
        // Predicated region
        $region29: #{tpu_custom_call.1} parent=11 // pred_check
          %p237 = pneg %p174
        $region30: #{tpu_custom_call.1} parent=11 // pred_check_branch
          %239 = sbr.rel (%p237) target = $region32
        $region31: #{tpu_custom_call.1} parent=11 // pred_region
          _
        $region32: #{tpu_custom_call.1} parent=11 // pred_fallthru
          _
      $region12: #{tpu_custom_call.1} parent=5 // pred_fallthru
        _
      %p240 = scmp.lt.s32.totalorder %s17, 2
      // Predicated region
      $region33: #{tpu_custom_call.1} parent=5 // pred_check
        %p241 = pneg %p240
      $region34: #{tpu_custom_call.1} parent=5 // pred_check_branch
        %243 = sbr.rel (%p241) target = $region36
      $region35: #{tpu_custom_call.1} parent=5 // pred_region
        // Predicated region
        $region37: #{tpu_custom_call.1} parent=35 // pred_check
          %p244 = pneg %p37
        $region38: #{tpu_custom_call.1} parent=35 // pred_check_branch
          %246 = sbr.rel (%p244) target = $region40
        $region39: #{tpu_custom_call.1} parent=35 // pred_region
          %s247 = sand.u32 %s27, 1
          %s248 = scalar_lea.sflag [#allocation3], %s247
          %s249 = sand.u32 %s27, 1
          %s250 = smul.addr %s249, 8
          %s251 = scalar_lea.vmem [#allocation2], %s250
          %s253 = ssub.s32 128, 128
          %254 = vsyncadd %s248, %s253
          %s255 = smul.addr %s17, 128
          %s256 = scalar_lea.hbm %s0, %s255
          %s258 = sshll.u32 %s251, 4
          %s259 = int_to_ptr.vmem [resolvable:$true] %s258
          %261 = dma.hbm_to_vmem [thread:$0]  %s256, 128, %s259, %s248
        $region40: #{tpu_custom_call.1} parent=35 // pred_fallthru
          _
        // Predicated region
        $region41: #{tpu_custom_call.1} parent=35 // pred_check
          %p262 = pneg %p63
        $region42: #{tpu_custom_call.1} parent=35 // pred_check_branch
          %264 = sbr.rel (%p262) target = $region44
        $region43: #{tpu_custom_call.1} parent=35 // pred_region
          %p265 = scmp.lt.s32.totalorder %s17, 1
          %s266 = scalar_select %p265, %s17, 1
          %s267 = smul.addr %s266, 8
          %s268 = scalar_lea.vmem %s1, %s267
        $region44: #{tpu_custom_call.1} parent=35 // pred_fallthru
          _
      $region36: #{tpu_custom_call.1} parent=5 // pred_fallthru
        _
      %p269 = scmp.le.s32.totalorder 1, %s17
      %p270 = scmp.lt.s32.totalorder %s17, 3
      %p271 = pnand %p269, %p270
      %p272 = pneg %p271
      // Predicated region
      $region45: #{tpu_custom_call.1} parent=5 // pred_check
        _
      $region46: #{tpu_custom_call.1} parent=5 // pred_check_branch
        %274 = sbr.rel (%p271) target = $region48
      $region47: #{tpu_custom_call.1} parent=5 // pred_region
        %s275 = ssub.s32 %s17, 1
        %s276 = sand.u32 %s30, 1
        %s277 = scalar_lea.sflag [#allocation3], %s276
        %s278 = sand.u32 %s30, 1
        %s279 = smul.addr %s278, 8
        %s280 = scalar_lea.vmem [#allocation2], %s279
        // Predicated region
        $region49: #{tpu_custom_call.1} parent=47 // pred_check
          %p281 = pneg %p43
        $region50: #{tpu_custom_call.1} parent=47 // pred_check_branch
          %283 = sbr.rel (%p281) target = $region52
        $region51: #{tpu_custom_call.1} parent=47 // pred_region
          %284 = dma.done %s277, 128
        $region52: #{tpu_custom_call.1} parent=47 // pred_fallthru
          _
        // Predicated region
        $region53: #{tpu_custom_call.1} parent=47 // pred_check
          %p285 = pneg %p132
        $region54: #{tpu_custom_call.1} parent=47 // pred_check_branch
          %287 = sbr.rel (%p285) target = $region56
        $region55: #{tpu_custom_call.1} parent=47 // pred_region
          %288 = dma.done [#allocation5], 512
        $region56: #{tpu_custom_call.1} parent=47 // pred_fallthru
          _
        %s289 = sand.u32 %s30, 1
        %s290 = scalar_lea.sflag [#allocation3], %s289
        %s291 = sand.u32 %s30, 1
        %s292 = smul.addr %s291, 8
        %s293 = scalar_lea.vmem [#allocation2], %s292
        %p294 = pneg %p43
        %p295 = pneg %p40
        %p296 = scmp.lt.s32.totalorder %s22, 1
        %s297 = scalar_select %p296, %s22, 1
        %s298 = smul.addr %s297, 8
        %s299 = scalar_lea.vmem %s1, %s298
        %p300 = pneg %p69
        %p301 = pneg %p66
        %p302 = pneg %p90
        %p303 = pneg %p87
        %p304 = pneg %p111
        %p305 = pneg %p108
        %p306 = pneg %p132
        %p307 = pneg %p129
        %p308 = pneg %p153
        %p309 = pneg %p150
        %p310 = pneg %p174
        %p311 = pneg %p171
        %p312 = pneg %p200
        %p313 = pneg %p197
        %p314 = scmp.lt.s32.totalorder %s22, 1
        %s315 = scalar_select %p314, %s22, 1
        %s316 = smul.addr %s315, 8
        %s317 = scalar_lea.vmem %s7, %s316
        %p318 = scmp.lt.s32.totalorder %s22, 1
        %s319 = scalar_select %p318, %s22, 1
        %s320 = smul.addr %s319, 8
        %s321 = scalar_lea.vmem %s1, %s320
        %p322 = scmp.lt.s32.totalorder %s22, 1
        %s323 = scalar_select %p322, %s22, 1
        %s324 = smul.addr %s323, 8
        %s325 = scalar_lea.vmem %s7, %s324
        %v326 = vld [vmem:[%s6] sm:$0x1]
        %v327 = vld [vmem:[%s6 + $0x1] sm:$0x1]
        %v328 = vld [vmem:[%s6 + $0x2] sm:$0x1]
        %v329 = vld [vmem:[%s6 + $0x3] sm:$0x1]
        %v330 = vld [vmem:[%s6 + $0x4] sm:$0x1]
        %v331 = vld [vmem:[%s6 + $0x5] sm:$0x1]
        %v332 = vld [vmem:[%s6 + $0x6] sm:$0x1]
        %v333 = vld [vmem:[%s280] sm:$0xff]
        %v334 = vld [vmem:[%s321] sm:$0xff]
        %v335 = vld [vmem:[%s2] sm:$0xff]
        %v336 = vld [vmem:[%s2 + $0x8] sm:$0xff]
        %v337 = vld [vmem:[%s2 + $0x10] sm:$0xff]
        %v338 = vld [vmem:[%s2 + $0x18] sm:$0xff]
        %v339 = vlaneseq
        %v340 = vshrl.u32 %v339, 7
        %v341 = vsub.s32 0, %v340
        %v342 = vrot.slane %v326, %v341
        %vm343 = vcmask 261120
        %v345 = vsel %vm343, %v333, 0
        %347 = vmatprep.subr.mxu0 0.0
        %348 = vmatpush1.msra.mxu0 %v335
        %349 = vmatprep.subr.mxu0 0.0
        %350 = vmatpush1.msra.mxu0 %v336
        %351 = vmatprep.subr.mxu0 0.0
        %352 = vmatpush1.msra.mxu0 %v337
        %353 = vmatprep.subr.mxu0 0.0
        %354 = vmatpush1.msra.mxu0 %v338
        %355 = vmatprep.subr.mxu0 0.0
        %356 = vmatpush1.msra.mxu0 0.0
        %357 = vmatprep.subr.mxu0 0.0
        %358 = vmatpush1.msra.mxu0 0.0
        %359 = vmatprep.subr.mxu0 0.0
        %360 = vmatpush1.msra.mxu0 0.0
        %361 = vmatprep.subr.mxu0 0.0
        %362 = vmatpush1.msra.mxu0 0.0
        %363 = vmatprep.subr.mxu0 0.0
        %364 = vmatpush1.msra.mxu0 0.0
        %365 = vmatprep.subr.mxu0 0.0
        %366 = vmatpush1.msra.mxu0 0.0
        %367 = vmatprep.subr.mxu0 0.0
        %368 = vmatpush1.msra.mxu0 0.0
        %369 = vmatprep.subr.mxu0 0.0
        %370 = vmatpush1.msra.mxu0 0.0
        %371 = vmatprep.subr.mxu0 0.0
        %372 = vmatpush1.msra.mxu0 0.0
        %373 = vmatprep.subr.mxu0 0.0
        %374 = vmatpush1.msra.mxu0 0.0
        %375 = vmatprep.subr.mxu0 0.0
        %376 = vmatpush1.msra.mxu0 0.0
        %377 = vmatprep.subr.mxu0 0.0
        %378 = vmatpush1.msra.mxu0 0.0
        %379 = vmatprep.subr.mxu0 0.0
        %380 = vmatpush1.msra.mxu0 0.0
        %381 = vmatprep.subr.mxu0 0.0
        %382 = vmatpush1.msra.mxu0 0.0
        %383 = vmatprep.subr.mxu0 0.0
        %384 = vmatpush1.msra.mxu0 0.0
        %385 = vmatprep.subr.mxu0 0.0
        %386 = vmatpush1.msra.mxu0 0.0
        %387 = vmatprep.subr.mxu0 0.0
        %388 = vmatpush1.msra.mxu0 0.0
        %389 = vmatprep.subr.mxu0 0.0
        %390 = vmatpush1.msra.mxu0 0.0
        %391 = vmatprep.subr.mxu0 0.0
        %392 = vmatpush1.msra.mxu0 0.0
        %393 = vmatprep.subr.mxu0 0.0
        %394 = vmatpush1.msra.mxu0 0.0
        %395 = vmatprep.subr.mxu0 0.0
        %396 = vmatpush1.msra.mxu0 0.0
        %397 = vmatprep.subr.mxu0 0.0
        %398 = vmatpush1.msra.mxu0 0.0
        %399 = vmatprep.subr.mxu0 0.0
        %400 = vmatpush1.msra.mxu0 0.0
        %401 = vmatprep.subr.mxu0 0.0
        %402 = vmatpush1.msra.mxu0 0.0
        %403 = vmatprep.subr.mxu0 0.0
        %404 = vmatpush1.msra.mxu0 0.0
        %405 = vmatprep.subr.mxu0 0.0
        %406 = vmatpush1.msra.mxu0 0.0
        %407 = vmatprep.subr.mxu0 0.0
        %408 = vmatpush1.msra.mxu0 0.0
        %409 = vmatprep.subr.mxu0 0.0
        %410 = vmatpush1.msra.mxu0 0.0
        %411 = vmatprep.mubr.f32.mxu0 0.0
        %412 = vmatmul.mubr.f32.gmra.mrb[0].mxu0 %v345
        %v413 = vpop.f32.mrb[0].mxu0
        %v414 = vadd.f32 %v342, %v413
        %v415 = vpop.f32.mrb[0].mxu0
        %416 = vdwg.mxu0
        %vm417 = vcmp.gt.f32.partialorder %v414, 0.0
        %v418 = vmul.f32 %v414, 1.442695
        %v419 = vpow.pop %v418
        %v420 = vsub.f32 %v419, 1.0
        %v421 = vsel %vm417, %v414, %v420
        %v422 = vld [vmem:[%s3] sm:$0xff]
        %v423 = vld [vmem:[%s3 + $0x8] sm:$0xff]
        %v424 = vld [vmem:[%s3 + $0x10] sm:$0xff]
        %v425 = vld [vmem:[%s3 + $0x18] sm:$0xff]
        %v426 = vlaneseq
        %v427 = vshrl.u32 %v426, 7
        %v428 = vsub.s32 0, %v427
        %v429 = vrot.slane %v327, %v428
        %v431 = vsel %vm343, %v421, 0
        %433 = vmatprep.subr.mxu0 0.0
        %434 = vmatpush1.msra.mxu0 %v422
        %435 = vmatprep.subr.mxu0 0.0
        %436 = vmatpush1.msra.mxu0 %v423
        %437 = vmatprep.subr.mxu0 0.0
        %438 = vmatpush1.msra.mxu0 %v424
        %439 = vmatprep.subr.mxu0 0.0
        %440 = vmatpush1.msra.mxu0 %v425
        %441 = vmatprep.subr.mxu0 0.0
        %442 = vmatpush1.msra.mxu0 0.0
        %443 = vmatprep.subr.mxu0 0.0
        %444 = vmatpush1.msra.mxu0 0.0
        %445 = vmatprep.subr.mxu0 0.0
        %446 = vmatpush1.msra.mxu0 0.0
        %447 = vmatprep.subr.mxu0 0.0
        %448 = vmatpush1.msra.mxu0 0.0
        %449 = vmatprep.subr.mxu0 0.0
        %450 = vmatpush1.msra.mxu0 0.0
        %451 = vmatprep.subr.mxu0 0.0
        %452 = vmatpush1.msra.mxu0 0.0
        %453 = vmatprep.subr.mxu0 0.0
        %454 = vmatpush1.msra.mxu0 0.0
        %455 = vmatprep.subr.mxu0 0.0
        %456 = vmatpush1.msra.mxu0 0.0
        %457 = vmatprep.subr.mxu0 0.0
        %458 = vmatpush1.msra.mxu0 0.0
        %459 = vmatprep.subr.mxu0 0.0
        %460 = vmatpush1.msra.mxu0 0.0
        %461 = vmatprep.subr.mxu0 0.0
        %462 = vmatpush1.msra.mxu0 0.0
        %463 = vmatprep.subr.mxu0 0.0
        %464 = vmatpush1.msra.mxu0 0.0
        %465 = vmatprep.subr.mxu0 0.0
        %466 = vmatpush1.msra.mxu0 0.0
        %467 = vmatprep.subr.mxu0 0.0
        %468 = vmatpush1.msra.mxu0 0.0
        %469 = vmatprep.subr.mxu0 0.0
        %470 = vmatpush1.msra.mxu0 0.0
        %471 = vmatprep.subr.mxu0 0.0
        %472 = vmatpush1.msra.mxu0 0.0
        %473 = vmatprep.subr.mxu0 0.0
        %474 = vmatpush1.msra.mxu0 0.0
        %475 = vmatprep.subr.mxu0 0.0
        %476 = vmatpush1.msra.mxu0 0.0
        %477 = vmatprep.subr.mxu0 0.0
        %478 = vmatpush1.msra.mxu0 0.0
        %479 = vmatprep.subr.mxu0 0.0
        %480 = vmatpush1.msra.mxu0 0.0
        %481 = vmatprep.subr.mxu0 0.0
        %482 = vmatpush1.msra.mxu0 0.0
        %483 = vmatprep.subr.mxu0 0.0
        %484 = vmatpush1.msra.mxu0 0.0
        %485 = vmatprep.subr.mxu0 0.0
        %486 = vmatpush1.msra.mxu0 0.0
        %487 = vmatprep.subr.mxu0 0.0
        %488 = vmatpush1.msra.mxu0 0.0
        %489 = vmatprep.subr.mxu0 0.0
        %490 = vmatpush1.msra.mxu0 0.0
        %491 = vmatprep.subr.mxu0 0.0
        %492 = vmatpush1.msra.mxu0 0.0
        %493 = vmatprep.subr.mxu0 0.0
        %494 = vmatpush1.msra.mxu0 0.0
        %495 = vmatprep.subr.mxu0 0.0
        %496 = vmatpush1.msra.mxu0 0.0
        %497 = vmatprep.mubr.f32.mxu0 0.0
        %498 = vmatmul.mubr.f32.gmra.mrb[0].mxu0 %v431
        %v499 = vpop.f32.mrb[0].mxu0
        %v500 = vadd.f32 %v429, %v499
        %v501 = vpop.f32.mrb[0].mxu0
        %502 = vdwg.mxu0
        %vm503 = vcmp.gt.f32.partialorder %v500, 0.0
        %v504 = vmul.f32 %v500, 1.442695
        %v505 = vpow.pop %v504
        %v506 = vsub.f32 %v505, 1.0
        %v507 = vsel %vm503, %v500, %v506
        %v508 = vld [vmem:[#allocation4] sm:$0xff]
        %v509 = vld [vmem:[#allocation4 + $0x8] sm:$0xff]
        %v510 = vld [vmem:[#allocation4 + $0x10] sm:$0xff]
        %v511 = vld [vmem:[#allocation4 + $0x18] sm:$0xff]
        %v512 = vlaneseq
        %v513 = vshrl.u32 %v512, 7
        %v514 = vsub.s32 0, %v513
        %v515 = vrot.slane %v328, %v514
        %v517 = vsel %vm343, %v507, 0
        %519 = vmatprep.subr.mxu0 0.0
        %520 = vmatpush1.msra.mxu0 %v508
        %521 = vmatprep.subr.mxu0 0.0
        %522 = vmatpush1.msra.mxu0 %v509
        %523 = vmatprep.subr.mxu0 0.0
        %524 = vmatpush1.msra.mxu0 %v510
        %525 = vmatprep.subr.mxu0 0.0
        %526 = vmatpush1.msra.mxu0 %v511
        %527 = vmatprep.subr.mxu0 0.0
        %528 = vmatpush1.msra.mxu0 0.0
        %529 = vmatprep.subr.mxu0 0.0
        %530 = vmatpush1.msra.mxu0 0.0
        %531 = vmatprep.subr.mxu0 0.0
        %532 = vmatpush1.msra.mxu0 0.0
        %533 = vmatprep.subr.mxu0 0.0
        %534 = vmatpush1.msra.mxu0 0.0
        %535 = vmatprep.subr.mxu0 0.0
        %536 = vmatpush1.msra.mxu0 0.0
        %537 = vmatprep.subr.mxu0 0.0
        %538 = vmatpush1.msra.mxu0 0.0
        %539 = vmatprep.subr.mxu0 0.0
        %540 = vmatpush1.msra.mxu0 0.0
        %541 = vmatprep.subr.mxu0 0.0
        %542 = vmatpush1.msra.mxu0 0.0
        %543 = vmatprep.subr.mxu0 0.0
        %544 = vmatpush1.msra.mxu0 0.0
        %545 = vmatprep.subr.mxu0 0.0
        %546 = vmatpush1.msra.mxu0 0.0
        %547 = vmatprep.subr.mxu0 0.0
        %548 = vmatpush1.msra.mxu0 0.0
        %549 = vmatprep.subr.mxu0 0.0
        %550 = vmatpush1.msra.mxu0 0.0
        %551 = vmatprep.subr.mxu0 0.0
        %552 = vmatpush1.msra.mxu0 0.0
        %553 = vmatprep.subr.mxu0 0.0
        %554 = vmatpush1.msra.mxu0 0.0
        %555 = vmatprep.subr.mxu0 0.0
        %556 = vmatpush1.msra.mxu0 0.0
        %557 = vmatprep.subr.mxu0 0.0
        %558 = vmatpush1.msra.mxu0 0.0
        %559 = vmatprep.subr.mxu0 0.0
        %560 = vmatpush1.msra.mxu0 0.0
        %561 = vmatprep.subr.mxu0 0.0
        %562 = vmatpush1.msra.mxu0 0.0
        %563 = vmatprep.subr.mxu0 0.0
        %564 = vmatpush1.msra.mxu0 0.0
        %565 = vmatprep.subr.mxu0 0.0
        %566 = vmatpush1.msra.mxu0 0.0
        %567 = vmatprep.subr.mxu0 0.0
        %568 = vmatpush1.msra.mxu0 0.0
        %569 = vmatprep.subr.mxu0 0.0
        %570 = vmatpush1.msra.mxu0 0.0
        %571 = vmatprep.subr.mxu0 0.0
        %572 = vmatpush1.msra.mxu0 0.0
        %573 = vmatprep.subr.mxu0 0.0
        %574 = vmatpush1.msra.mxu0 0.0
        %575 = vmatprep.subr.mxu0 0.0
        %576 = vmatpush1.msra.mxu0 0.0
        %577 = vmatprep.subr.mxu0 0.0
        %578 = vmatpush1.msra.mxu0 0.0
        %579 = vmatprep.subr.mxu0 0.0
        %580 = vmatpush1.msra.mxu0 0.0
        %581 = vmatprep.subr.mxu0 0.0
        %582 = vmatpush1.msra.mxu0 0.0
        %583 = vmatprep.mubr.f32.mxu0 0.0
        %584 = vmatmul.mubr.f32.gmra.mrb[0].mxu0 %v517
        %v585 = vpop.f32.mrb[0].mxu0
        %v586 = vadd.f32 %v515, %v585
        %v587 = vpop.f32.mrb[0].mxu0
        %588 = vdwg.mxu0
        %590 = vset.pattern.permute.xlu0 0
        %591 = vperm.xlu0 %590, %v334
        %v592 = vpop.permute.xlu0 %591
        %v594 = vlaneseq
        %v595 = vshrl.u32 %v594, 7
        %v596 = vsub.s32 0, %v595
        %v597 = vrot.slane %v329, %v596
        %v598 = vmul.f32 %v592, %v597
        %v599 = vadd.f32 %v586, %v598
        %600 = vset.pattern.permute.xlu0 1
        %601 = vperm.xlu0 %600, %v334
        %v602 = vpop.permute.xlu0 %601
        %v604 = vlaneseq
        %v605 = vshrl.u32 %v604, 7
        %v606 = vsub.s32 0, %v605
        %v607 = vrot.slane %v330, %v606
        %v608 = vmul.f32 %v602, %v607
        %v609 = vadd.f32 %v599, %v608
        %610 = vset.pattern.permute.xlu0 2
        %611 = vperm.xlu0 %610, %v334
        %v612 = vpop.permute.xlu0 %611
        %v614 = vlaneseq
        %v615 = vshrl.u32 %v614, 7
        %v616 = vsub.s32 0, %v615
        %v617 = vrot.slane %v331, %v616
        %v618 = vmul.f32 %v612, %v617
        %v619 = vadd.f32 %v609, %v618
        %vm620 = vcmp.gt.f32.partialorder %v619, 0.0
        %v621 = vmul.f32 %v619, 1.442695
        %v622 = vpow.pop %v621
        %v623 = vsub.f32 %v622, 1.0
        %v624 = vsel %vm620, %v619, %v623
        %v625 = vld [vmem:[%s5] sm:$0xff]
        %v626 = vld [vmem:[%s5 + $0x8] sm:$0xff]
        %v627 = vld [vmem:[%s5 + $0x10] sm:$0xff]
        %v628 = vld [vmem:[%s5 + $0x18] sm:$0xff]
        %v629 = vlaneseq
        %v630 = vshrl.u32 %v629, 7
        %v631 = vsub.s32 0, %v630
        %v632 = vrot.slane %v332, %v631
        %v634 = vsel %vm343, %v624, 0
        %636 = vmatprep.subr.mxu0 0.0
        %637 = vmatpush1.msra.mxu0 %v625
        %638 = vmatprep.subr.mxu0 0.0
        %639 = vmatpush1.msra.mxu0 %v626
        %640 = vmatprep.subr.mxu0 0.0
        %641 = vmatpush1.msra.mxu0 %v627
        %642 = vmatprep.subr.mxu0 0.0
        %643 = vmatpush1.msra.mxu0 %v628
        %644 = vmatprep.subr.mxu0 0.0
        %645 = vmatpush1.msra.mxu0 0.0
        %646 = vmatprep.subr.mxu0 0.0
        %647 = vmatpush1.msra.mxu0 0.0
        %648 = vmatprep.subr.mxu0 0.0
        %649 = vmatpush1.msra.mxu0 0.0
        %650 = vmatprep.subr.mxu0 0.0
        %651 = vmatpush1.msra.mxu0 0.0
        %652 = vmatprep.subr.mxu0 0.0
        %653 = vmatpush1.msra.mxu0 0.0
        %654 = vmatprep.subr.mxu0 0.0
        %655 = vmatpush1.msra.mxu0 0.0
        %656 = vmatprep.subr.mxu0 0.0
        %657 = vmatpush1.msra.mxu0 0.0
        %658 = vmatprep.subr.mxu0 0.0
        %659 = vmatpush1.msra.mxu0 0.0
        %660 = vmatprep.subr.mxu0 0.0
        %661 = vmatpush1.msra.mxu0 0.0
        %662 = vmatprep.subr.mxu0 0.0
        %663 = vmatpush1.msra.mxu0 0.0
        %664 = vmatprep.subr.mxu0 0.0
        %665 = vmatpush1.msra.mxu0 0.0
        %666 = vmatprep.subr.mxu0 0.0
        %667 = vmatpush1.msra.mxu0 0.0
        %668 = vmatprep.subr.mxu0 0.0
        %669 = vmatpush1.msra.mxu0 0.0
        %670 = vmatprep.subr.mxu0 0.0
        %671 = vmatpush1.msra.mxu0 0.0
        %672 = vmatprep.subr.mxu0 0.0
        %673 = vmatpush1.msra.mxu0 0.0
        %674 = vmatprep.subr.mxu0 0.0
        %675 = vmatpush1.msra.mxu0 0.0
        %676 = vmatprep.subr.mxu0 0.0
        %677 = vmatpush1.msra.mxu0 0.0
        %678 = vmatprep.subr.mxu0 0.0
        %679 = vmatpush1.msra.mxu0 0.0
        %680 = vmatprep.subr.mxu0 0.0
        %681 = vmatpush1.msra.mxu0 0.0
        %682 = vmatprep.subr.mxu0 0.0
        %683 = vmatpush1.msra.mxu0 0.0
        %684 = vmatprep.subr.mxu0 0.0
        %685 = vmatpush1.msra.mxu0 0.0
        %686 = vmatprep.subr.mxu0 0.0
        %687 = vmatpush1.msra.mxu0 0.0
        %688 = vmatprep.subr.mxu0 0.0
        %689 = vmatpush1.msra.mxu0 0.0
        %690 = vmatprep.subr.mxu0 0.0
        %691 = vmatpush1.msra.mxu0 0.0
        %692 = vmatprep.subr.mxu0 0.0
        %693 = vmatpush1.msra.mxu0 0.0
        %694 = vmatprep.subr.mxu0 0.0
        %695 = vmatpush1.msra.mxu0 0.0
        %696 = vmatprep.subr.mxu0 0.0
        %697 = vmatpush1.msra.mxu0 0.0
        %698 = vmatprep.subr.mxu0 0.0
        %699 = vmatpush1.msra.mxu0 0.0
        %700 = vmatprep.mubr.f32.mxu0 0.0
        %701 = vmatmul.mubr.f32.gmra.mrb[0].mxu0 %v634
        %v702 = vpop.f32.mrb[0].mxu0
        %v703 = vadd.f32 %v632, %v702
        %v704 = vpop.f32.mrb[0].mxu0
        %705 = vdwg.mxu0
        %v706 = vlaneseq
        %v707 = vand.u32 %v706, 127
        %vm708 = vcmp.eq.s32.totalorder %v707, 0
        %v709 = vsub.f32 0.0, %v703
        %v710 = vmul.f32 %v709, 1.442695
        %v711 = vpow.pop %v710
        %v712 = vadd.f32 %v711, 1.0
        %v713 = vrcp.pop %v712
        %vm714 = vcmp.eq.s32.totalorder %v707, 1
        %v715 = vtanh.pop %v703
        %vm716 = vcmp.gt.f32.partialorder %v703, 0.0
        %v717 = vmul.f32 %v703, 1.442695
        %v718 = vpow.pop %v717
        %v719 = vsub.f32 %v718, 1.0
        %v720 = vsel %vm716, %v703, %v719
        %v721 = vsel %vm714, %v715, %v720
        %v722 = vsel %vm708, %v713, %v721
        %vm723 = vcmask 23552
        %724 = vst.msk [vmem:[%s325] sm:$0xff] %vm723, %v722
        %p725 = scmp.lt.s32.totalorder %s22, 1
        %s726 = scalar_select %p725, %s22, 1
        %s727 = smul.addr %s726, 8
        %s728 = scalar_lea.vmem %s7, %s727
        // Predicated region
        $region57: #{tpu_custom_call.1} parent=47 // pred_check
          %p729 = pneg %p197
        $region58: #{tpu_custom_call.1} parent=47 // pred_check_branch
          %731 = sbr.rel (%p729) target = $region60
        $region59: #{tpu_custom_call.1} parent=47 // pred_region
          _
        $region60: #{tpu_custom_call.1} parent=47 // pred_fallthru
          _
      $region48: #{tpu_custom_call.1} parent=5 // pred_fallthru
        _
      %p732 = scmp.le.s32.totalorder 2, %s17
      // Predicated region
      $region61: #{tpu_custom_call.1} parent=5 // pred_check
        %p733 = pneg %p732
      $region62: #{tpu_custom_call.1} parent=5 // pred_check_branch
        %735 = sbr.rel (%p733) target = $region64
      $region63: #{tpu_custom_call.1} parent=5 // pred_region
        %s736 = ssub.s32 %s17, 2
        // Predicated region
        $region65: #{tpu_custom_call.1} parent=63 // pred_check
          %p737 = pneg %p203
        $region66: #{tpu_custom_call.1} parent=63 // pred_check_branch
          %739 = sbr.rel (%p737) target = $region68
        $region67: #{tpu_custom_call.1} parent=63 // pred_region
          %p740 = scmp.lt.s32.totalorder %s23, 1
          %s741 = scalar_select %p740, %s23, 1
          %s742 = smul.addr %s741, 8
          %s743 = scalar_lea.vmem %s7, %s742
        $region68: #{tpu_custom_call.1} parent=63 // pred_fallthru
          _
      $region64: #{tpu_custom_call.1} parent=5 // pred_fallthru
        _
    $region6: #{tpu_custom_call.1} parent=1 // loop_footer
      %s21 = sadd.s32 1, %s17
    $region7: #{tpu_custom_call.1} parent=1 // loop_footer_branch
      %16 = sbr.rel target = $region3
    $region8: #{tpu_custom_call.1} parent=1 // loop_exit
      _
    %744 = vsyncpa [#allocation3], 1
    %s745 = scalar_lea.sflag [#allocation3], 1
    %746 = vsyncpa %s745, 1
    %747 = vsyncpa [#allocation5], 1

</llo_original>
